<compile_context>
chip_gen: v5e
topology: v5e:2x2
jax: 0.10.0
libtpu: 0.0.40
codegen_flags: <defaults>
</compile_context>

<pallas_src>
import functools

import jax
import jax.numpy as jnp
from jax.experimental import pallas as pl
from jax.experimental.pallas import tpu as pltpu


# ---------------------------------------------------------------------------
# Kernel
# ---------------------------------------------------------------------------
def _tensorized_kernel(sigma_ref, hidden_ref, w_ref, b_ref, out_ref, scaled_ref,
                       *, build_once):
    """One (batch_block, a_block) tile of  out = (sigma khatri-rao hidden) @ W_flat + b.

    sigma_ref  : (bb, N)       hidden_ref : (bb, M)
    w_ref      : (N*M, ab)     b_ref      : (1, ab)
    out_ref    : (bb, ab)      scaled_ref : (bb, N*M) VMEM scratch in W's dtype
    """
    n_sigma = sigma_ref.shape[1]
    m_hidden = hidden_ref.shape[1]

    def build_scaled():
        # Row-wise Khatri-Rao product: scaled[b, n*M + m] = sigma[b, n] * hidden[b, m].
        # dim_sigma is small -> statically unrolled VPU multiplies.  The multiply
        # runs in the input dtype (native bf16 on v6e/v7x; Mosaic upcasts on v5e)
        # and the result is stored once in the weight dtype so the MXU is fed
        # natively (bf16 weights -> bf16 MXU operands, f32 accumulation).
        sigma = sigma_ref[...]
        hidden = hidden_ref[...]
        for n in range(n_sigma):
            scaled_ref[:, n * m_hidden:(n + 1) * m_hidden] = (
                sigma[:, n:n + 1] * hidden
            ).astype(scaled_ref.dtype)

    if build_once:
        # Single batch block: the scratch persists across grid steps, so the
        # build only has to run on the first A tile and is reused afterwards.
        pl.when(pl.program_id(0) == 0)(build_scaled)
    else:
        build_scaled()

    # One fused MXU matmul per tile, contraction depth K = dim_sigma * dim_hidden.
    acc = jnp.dot(scaled_ref[...], w_ref[...], preferred_element_type=jnp.float32)
    out_ref[...] = (acc + b_ref[...].astype(jnp.float32)).astype(out_ref.dtype)


# ---------------------------------------------------------------------------
# Parameter re-layout (one-time, outside the forward path)
# ---------------------------------------------------------------------------
def prepare_tensorized_params(W, bias, dtype=None):
    """W: (A, N, M) -> W_flat: (N*M, A) with W_flat[n*M + m, a] = W[a, n, m];
    bias: (A,) -> (1, A).  Optionally cast to `dtype` (e.g. bf16 weight path)."""
    a_dim, n_dim, m_dim = W.shape
    w_flat = jnp.transpose(W, (1, 2, 0)).reshape(n_dim * m_dim, a_dim)
    bias2d = bias.reshape(1, a_dim)
    if dtype is not None:
        w_flat = w_flat.astype(dtype)
        bias2d = bias2d.astype(dtype)
    return w_flat, bias2d


# ---------------------------------------------------------------------------
# Block planning
# ---------------------------------------------------------------------------
_VMEM_TARGET = 40 * 1024 * 1024   # headroom under v7x's 64 MiB / TC


def _round_up(x, m):
    return ((x + m - 1) // m) * m


def _plan_blocks(B, N, M, A, itemsizes, batch_block, a_block):
    s_it, h_it, w_it, o_it = itemsizes
    nm = N * M

    def footprint(bb, ab, n_a_blocks):
        w_bufs = 1 if n_a_blocks == 1 else 2          # invariant W is single-buffered
        return (nm * ab * w_it * w_bufs               # W block(s)
                + ab * w_it * w_bufs                  # bias block(s)
                + 2 * bb * (N * s_it + M * h_it + ab * o_it)  # double-buffered act/out
                + bb * nm * w_it)                     # scaled scratch

    # batch block: multiple of 8, <= 256, >= 2 grid steps whenever B > 8
    if batch_block is None:
        if B <= 8:
            bb = 8
        elif B < 256:
            bb = min(128, _round_up(-(-B // 2), 8))
        elif B < 512:
            bb = 128
        else:
            bb = 256
    else:
        bb = batch_block

    # A block: keep full A unless the resident W slab blows the VMEM budget
    if a_block is None:
        ab = A
        if footprint(bb, A, 1) > _VMEM_TARGET:
            cands = [c for c in (1024, 512, 256, 128) if c < A and A % c == 0]
            chosen = None
            for c in cands:                              # largest first
                if footprint(bb, c, 2) <= _VMEM_TARGET:
                    chosen = c
                    break
            if chosen is None and cands:
                chosen = cands[-1]
            if chosen is not None:
                ab = chosen
    else:
        ab = a_block
    assert A % ab == 0, "a_block must divide dim_hidden"
    assert ab == A or ab % 128 == 0, "a tiled a_block must be a multiple of 128"
    n_a = A // ab

    # last resort: shrink the batch block if still over budget
    while batch_block is None and footprint(bb, ab, n_a) > _VMEM_TARGET and bb > 8:
        bb = max(8, _round_up(bb // 2, 8))

    b_pad = _round_up(max(B, bb), bb)
    return bb, ab, b_pad, n_a, footprint(bb, ab, n_a)


# ---------------------------------------------------------------------------
# Forward wrapper
# ---------------------------------------------------------------------------
def tensorized_layer(sigma, hidden, w_flat, bias2d, *, batch_block=None,
                     a_block=None, vmem_limit_bytes=None):
    """Pallas TPU implementation of TensorizedLayer.forward.

    sigma  : (B, dim_sigma)
    hidden : (B, dim_hidden)
    w_flat : (dim_sigma * dim_hidden, dim_hidden)  -- from prepare_tensorized_params
    bias2d : (1, dim_hidden)
    returns: (B, dim_hidden)
    """
    B, N = sigma.shape
    B2, M = hidden.shape
    KM, A = w_flat.shape
    assert B == B2 and KM == N * M and bias2d.shape == (1, A)

    out_dtype = jnp.result_type(sigma.dtype, hidden.dtype, w_flat.dtype, bias2d.dtype)
    itemsizes = (jnp.dtype(sigma.dtype).itemsize, jnp.dtype(hidden.dtype).itemsize,
                 jnp.dtype(w_flat.dtype).itemsize, jnp.dtype(out_dtype).itemsize)

    bb, ab, b_pad, n_a, vmem_bytes = _plan_blocks(B, N, M, A, itemsizes,
                                                  batch_block, a_block)
    n_b = b_pad // bb
    nm = N * M

    # Pad the batch (zeros) so blocks tile evenly and batches > 8 get >= 2
    # "parallel" grid steps (keeps both v7x TensorCores busy).
    if b_pad != B:
        pad = ((0, b_pad - B), (0, 0))
        sigma = jnp.pad(sigma, pad)
        hidden = jnp.pad(hidden, pad)

    # Grid: A outer, batch inner -> each W tile is DMA'd from HBM exactly once.
    grid = (n_a, n_b)
    build_once = n_b == 1          # scaled scratch reusable across the A tiles
    # Reusing the scratch across A tiles is a cross-step dependence, so keep the
    # grid sequential in that case; otherwise both axes are independent.
    dims = ("arbitrary", "arbitrary") if build_once else ("parallel", "parallel")

    # Grid-invariant W / bias (single A tile) only need one VMEM buffer.
    inv_pm = pl.Buffered(1) if n_a == 1 else None

    if vmem_limit_bytes is None:
        vmem_limit_bytes = int(min(max(int(vmem_bytes * 1.3) + (2 << 20), 16 << 20),
                                   112 << 20))

    cost = pl.CostEstimate(
        flops=int(2 * b_pad * nm * (A + 1)),
        transcendentals=0,
        bytes_accessed=int(b_pad * N * itemsizes[0] + b_pad * M * itemsizes[1]
                           + (nm + 1) * A * itemsizes[2] + b_pad * A * itemsizes[3]),
    )

    out = pl.pallas_call(
        functools.partial(_tensorized_kernel, build_once=build_once),
        out_shape=jax.ShapeDtypeStruct((b_pad, A), out_dtype),
        grid=grid,
        in_specs=[
            pl.BlockSpec((bb, N), lambda a, b: (b, 0)),
            pl.BlockSpec((bb, M), lambda a, b: (b, 0)),
            pl.BlockSpec((nm, ab), lambda a, b: (0, a), pipeline_mode=inv_pm),
            pl.BlockSpec((1, ab), lambda a, b: (0, a), pipeline_mode=inv_pm),
        ],
        out_specs=pl.BlockSpec((bb, ab), lambda a, b: (b, a)),
        scratch_shapes=[pltpu.VMEM((bb, nm), w_flat.dtype)],
        compiler_params=pltpu.CompilerParams(
            dimension_semantics=dims,
            vmem_limit_bytes=vmem_limit_bytes,
        ),
        cost_estimate=cost,
    )(sigma, hidden, w_flat, bias2d)

    return out[:B] if b_pad != B else out


# ---------------------------------------------------------------------------
# Self-test
# ---------------------------------------------------------------------------
if __name__ == "__main__":
    def reference(sigma, W, hidden, bias):
        return jnp.einsum("bn,anm,bm->ba",
                          sigma.astype(jnp.float32), W.astype(jnp.float32),
                          hidden.astype(jnp.float32)) + bias.astype(jnp.float32)

    def xavier_w(key, dim_hidden, dim_sigma):
        fan_in = dim_sigma * dim_hidden
        fan_out = dim_hidden * dim_hidden
        bound = (6.0 / (fan_in + fan_out)) ** 0.5
        return jax.random.uniform(key, (dim_hidden, dim_sigma, dim_hidden),
                                  minval=-bound, maxval=bound, dtype=jnp.float32)

    key = jax.random.PRNGKey(0)

    # ---- test 1: f32, small shapes, 2 batch blocks, grid-invariant W -------
    batch, dim_hidden, dim_sigma = 16, 32, 8
    k1, k2, k3, key = jax.random.split(key, 4)
    sigma = jax.random.normal(k1, (batch, dim_sigma), dtype=jnp.float32)
    hidden = jax.random.normal(k2, (batch, dim_hidden), dtype=jnp.float32)
    W = xavier_w(k3, dim_hidden, dim_sigma)
    bias = jnp.full((dim_hidden,), 0.1, dtype=jnp.float32)
    w_flat, bias2d = prepare_tensorized_params(W, bias)

    out = jax.block_until_ready(
        jax.jit(tensorized_layer)(sigma, hidden, w_flat, bias2d))
    ref = reference(sigma, W, hidden, bias)
    assert out.shape == (batch, dim_hidden)
    assert jnp.allclose(out, ref, atol=1e-4, rtol=1e-4), (
        f"max abs err = {float(jnp.max(jnp.abs(out - ref)))}")

    # ---- test 2: bf16 weight path + A tiling (2 A tiles, 1 batch block) ----
    batch, dim_hidden, dim_sigma = 8, 256, 4
    k1, k2, k3, key = jax.random.split(key, 4)
    sigma = jax.random.normal(k1, (batch, dim_sigma),
                              dtype=jnp.float32).astype(jnp.bfloat16)
    hidden = jax.random.normal(k2, (batch, dim_hidden),
                               dtype=jnp.float32).astype(jnp.bfloat16)
    W = xavier_w(k3, dim_hidden, dim_sigma).astype(jnp.bfloat16)
    bias = jnp.full((dim_hidden,), 0.1, dtype=jnp.bfloat16)
    w_flat, bias2d = prepare_tensorized_params(W, bias)

    fwd2 = jax.jit(lambda s, h, w, b: tensorized_layer(s, h, w, b, a_block=128))
    out2 = jax.block_until_ready(fwd2(sigma, hidden, w_flat, bias2d))
    ref2 = reference(sigma, W, hidden, bias)
    assert out2.shape == (batch, dim_hidden)
    # NOTE: the Khatri-Rao product is staged in the weight dtype (bf16 here)
    # before the contraction, so tolerance is looser than a pure f32 path.
    assert jnp.allclose(out2.astype(jnp.float32), ref2, atol=3e-2, rtol=3e-2), (
        f"max abs err = {float(jnp.max(jnp.abs(out2.astype(jnp.float32) - ref2)))}")

    print("KERNEL_OK")
</pallas_src>

<mosaic_0001>
module attributes {stable_mosaic.version = 11 : i64} {
  func.func @_tensorized_kernel(%arg0: i32, %arg1: i32, %arg2: memref<8x8xf32, #tpu.memory_space<vmem>>, %arg3: memref<8x32xf32, #tpu.memory_space<vmem>>, %arg4: memref<256x32xf32, #tpu.memory_space<vmem>>, %arg5: memref<1x32xf32, #tpu.memory_space<vmem>>, %arg6: memref<8x32xf32, #tpu.memory_space<vmem>>, %arg7: memref<8x256xf32, #tpu.memory_space<vmem>>) attributes {dimension_semantics = [#tpu.dimension_semantics<parallel>, #tpu.dimension_semantics<parallel>], iteration_bounds = array<i64: 1, 2>, scalar_prefetch = 0 : i64, scratch_operands = 1 : i64, tpu.core_type = #tpu.core_type<tc>, window_params = [{transform_indices = @transform_0, window_bounds = array<i64: 8, 8>}, {transform_indices = @transform_1, window_bounds = array<i64: 8, 32>}, {pipeline_mode = #tpu.pipeline_mode<synchronous>, transform_indices = @transform_2, window_bounds = array<i64: 256, 32>}, {pipeline_mode = #tpu.pipeline_mode<synchronous>, transform_indices = @transform_3, window_bounds = array<i64: 1, 32>}, {transform_indices = @transform_4, window_bounds = array<i64: 8, 32>}]} {
    %c0 = arith.constant 0 : index
    %c0_0 = arith.constant 0 : index
    %0 = vector.load %arg2[%c0, %c0_0] : memref<8x8xf32, #tpu.memory_space<vmem>>, vector<8x8xf32>
    %c0_1 = arith.constant 0 : index
    %c0_2 = arith.constant 0 : index
    %1 = vector.load %arg3[%c0_1, %c0_2] : memref<8x32xf32, #tpu.memory_space<vmem>>, vector<8x32xf32>
    %2 = vector.extract_strided_slice %0 {offsets = [0, 0], sizes = [8, 1], strides = [1, 1]} : vector<8x8xf32> to vector<8x1xf32>
    %3 = vector.broadcast %2 : vector<8x1xf32> to vector<8x32xf32>
    %4 = arith.mulf %3, %1 : vector<8x32xf32>
    %c0_3 = arith.constant 0 : index
    %c0_4 = arith.constant 0 : index
    %5 = vector.load %arg7[%c0_3, %c0_4] : memref<8x256xf32, #tpu.memory_space<vmem>>, vector<8x32xf32>
    tpu.vector_store %arg7[%c0_3, %c0_4], %4 {strides = array<i32>} : memref<8x256xf32, #tpu.memory_space<vmem>>, vector<8x32xf32>,
    %6 = vector.extract_strided_slice %0 {offsets = [0, 1], sizes = [8, 1], strides = [1, 1]} : vector<8x8xf32> to vector<8x1xf32>
    %7 = vector.broadcast %6 : vector<8x1xf32> to vector<8x32xf32>
    %8 = arith.mulf %7, %1 : vector<8x32xf32>
    %c0_5 = arith.constant 0 : index
    %c32 = arith.constant 32 : index
    %9 = vector.load %arg7[%c0_5, %c32] : memref<8x256xf32, #tpu.memory_space<vmem>>, vector<8x32xf32>
    tpu.vector_store %arg7[%c0_5, %c32], %8 {strides = array<i32>} : memref<8x256xf32, #tpu.memory_space<vmem>>, vector<8x32xf32>,
    %10 = vector.extract_strided_slice %0 {offsets = [0, 2], sizes = [8, 1], strides = [1, 1]} : vector<8x8xf32> to vector<8x1xf32>
    %11 = vector.broadcast %10 : vector<8x1xf32> to vector<8x32xf32>
    %12 = arith.mulf %11, %1 : vector<8x32xf32>
    %c0_6 = arith.constant 0 : index
    %c64 = arith.constant 64 : index
    %13 = vector.load %arg7[%c0_6, %c64] : memref<8x256xf32, #tpu.memory_space<vmem>>, vector<8x32xf32>
    tpu.vector_store %arg7[%c0_6, %c64], %12 {strides = array<i32>} : memref<8x256xf32, #tpu.memory_space<vmem>>, vector<8x32xf32>,
    %14 = vector.extract_strided_slice %0 {offsets = [0, 3], sizes = [8, 1], strides = [1, 1]} : vector<8x8xf32> to vector<8x1xf32>
    %15 = vector.broadcast %14 : vector<8x1xf32> to vector<8x32xf32>
    %16 = arith.mulf %15, %1 : vector<8x32xf32>
    %c0_7 = arith.constant 0 : index
    %c96 = arith.constant 96 : index
    %17 = vector.load %arg7[%c0_7, %c96] : memref<8x256xf32, #tpu.memory_space<vmem>>, vector<8x32xf32>
    tpu.vector_store %arg7[%c0_7, %c96], %16 {strides = array<i32>} : memref<8x256xf32, #tpu.memory_space<vmem>>, vector<8x32xf32>,
    %18 = vector.extract_strided_slice %0 {offsets = [0, 4], sizes = [8, 1], strides = [1, 1]} : vector<8x8xf32> to vector<8x1xf32>
    %19 = vector.broadcast %18 : vector<8x1xf32> to vector<8x32xf32>
    %20 = arith.mulf %19, %1 : vector<8x32xf32>
    %c0_8 = arith.constant 0 : index
    %c128 = arith.constant 128 : index
    %21 = vector.load %arg7[%c0_8, %c128] : memref<8x256xf32, #tpu.memory_space<vmem>>, vector<8x32xf32>
    tpu.vector_store %arg7[%c0_8, %c128], %20 {strides = array<i32>} : memref<8x256xf32, #tpu.memory_space<vmem>>, vector<8x32xf32>,
    %22 = vector.extract_strided_slice %0 {offsets = [0, 5], sizes = [8, 1], strides = [1, 1]} : vector<8x8xf32> to vector<8x1xf32>
    %23 = vector.broadcast %22 : vector<8x1xf32> to vector<8x32xf32>
    %24 = arith.mulf %23, %1 : vector<8x32xf32>
    %c0_9 = arith.constant 0 : index
    %c160 = arith.constant 160 : index
    %25 = vector.load %arg7[%c0_9, %c160] : memref<8x256xf32, #tpu.memory_space<vmem>>, vector<8x32xf32>
    tpu.vector_store %arg7[%c0_9, %c160], %24 {strides = array<i32>} : memref<8x256xf32, #tpu.memory_space<vmem>>, vector<8x32xf32>,
    %26 = vector.extract_strided_slice %0 {offsets = [0, 6], sizes = [8, 1], strides = [1, 1]} : vector<8x8xf32> to vector<8x1xf32>
    %27 = vector.broadcast %26 : vector<8x1xf32> to vector<8x32xf32>
    %28 = arith.mulf %27, %1 : vector<8x32xf32>
    %c0_10 = arith.constant 0 : index
    %c192 = arith.constant 192 : index
    %29 = vector.load %arg7[%c0_10, %c192] : memref<8x256xf32, #tpu.memory_space<vmem>>, vector<8x32xf32>
    tpu.vector_store %arg7[%c0_10, %c192], %28 {strides = array<i32>} : memref<8x256xf32, #tpu.memory_space<vmem>>, vector<8x32xf32>,
    %30 = vector.extract_strided_slice %0 {offsets = [0, 7], sizes = [8, 1], strides = [1, 1]} : vector<8x8xf32> to vector<8x1xf32>
    %31 = vector.broadcast %30 : vector<8x1xf32> to vector<8x32xf32>
    %32 = arith.mulf %31, %1 : vector<8x32xf32>
    %c0_11 = arith.constant 0 : index
    %c224 = arith.constant 224 : index
    %33 = vector.load %arg7[%c0_11, %c224] : memref<8x256xf32, #tpu.memory_space<vmem>>, vector<8x32xf32>
    tpu.vector_store %arg7[%c0_11, %c224], %32 {strides = array<i32>} : memref<8x256xf32, #tpu.memory_space<vmem>>, vector<8x32xf32>,
    %c0_12 = arith.constant 0 : index
    %c0_13 = arith.constant 0 : index
    %34 = vector.load %arg7[%c0_12, %c0_13] : memref<8x256xf32, #tpu.memory_space<vmem>>, vector<8x256xf32>
    %c0_14 = arith.constant 0 : index
    %c0_15 = arith.constant 0 : index
    %35 = vector.load %arg4[%c0_14, %c0_15] : memref<256x32xf32, #tpu.memory_space<vmem>>, vector<256x32xf32>
    %cst = arith.constant dense<0.000000e+00> : vector<8x32xf32>
    %36 = tpu.matmul %34, %35, %cst {dimension_numbers = #tpu.dot_dimension_numbers<[1], [0], [0], [1], [0, 0, 1, 1], [], []>} : vector<8x256xf32>, vector<256x32xf32>, vector<8x32xf32> -> vector<8x32xf32>
    %c0_16 = arith.constant 0 : index
    %c0_17 = arith.constant 0 : index
    %37 = vector.load %arg5[%c0_16, %c0_17] : memref<1x32xf32, #tpu.memory_space<vmem>>, vector<1x32xf32>
    %38 = vector.broadcast %37 : vector<1x32xf32> to vector<8x32xf32>
    %39 = arith.addf %36, %38 : vector<8x32xf32>
    %c0_18 = arith.constant 0 : index
    %c0_19 = arith.constant 0 : index
    %40 = vector.load %arg6[%c0_18, %c0_19] : memref<8x32xf32, #tpu.memory_space<vmem>>, vector<8x32xf32>
    tpu.vector_store %arg6[%c0_18, %c0_19], %39 {strides = array<i32>} : memref<8x32xf32, #tpu.memory_space<vmem>>, vector<8x32xf32>,
    return
  }
  func.func @transform_0(%arg0: i32, %arg1: i32) -> (i32, i32) {
    %c0_i32 = arith.constant 0 : i32
    %c0_i32_0 = arith.constant 0 : i32
    return %arg1, %c0_i32 : i32, i32
  }
  func.func @transform_1(%arg0: i32, %arg1: i32) -> (i32, i32) {
    %c0_i32 = arith.constant 0 : i32
    %c0_i32_0 = arith.constant 0 : i32
    return %arg1, %c0_i32 : i32, i32
  }
  func.func @transform_2(%arg0: i32, %arg1: i32) -> (i32, i32) {
    %c0_i32 = arith.constant 0 : i32
    %c0_i32_0 = arith.constant 0 : i32
    return %c0_i32, %arg0 : i32, i32
  }
  func.func @transform_3(%arg0: i32, %arg1: i32) -> (i32, i32) {
    %c0_i32 = arith.constant 0 : i32
    %c0_i32_0 = arith.constant 0 : i32
    return %c0_i32, %arg0 : i32, i32
  }
  func.func @transform_4(%arg0: i32, %arg1: i32) -> (i32, i32) {
    %c0_i32 = arith.constant 0 : i32
    return %arg1, %arg0 : i32, i32
  }
}

</mosaic_0001>

<llo_original>
// kernel: tensorized_layer.1
$region0: #{tensorized_layer.1}
  #allocation0 [shape = 'u32[]', space=smem, size = 0x4, offset = 0x4, fixed_abs, tag = 'smem constant byte address 0x4 - core index']
  #allocation1 [shape = 'u32[72,128]{1,0:T(1,128)}', space=vmem, size = 0x9000, scoped, tag = 'internal scratch']
  #allocation2 [shape = 'f32[8,256]{1,0:T(8,128)}', space=vmem, size = 0x2000, scoped, tag = 'scratch operand']
  %s0 = inlined_call_operand.vmem [shape: f32[16,8], index: 0, kind: input, shape index: {}]
  %s1 = inlined_call_operand.vmem [shape: f32[16,32], index: 1, kind: input, shape index: {}]
  %s2 = inlined_call_operand.vmem [shape: f32[256,32], index: 2, kind: input, shape index: {}]
  %s3 = inlined_call_operand.vmem [shape: f32[1,32], index: 3, kind: input, shape index: {}]
  %s4 = inlined_call_operand.hbm [shape: f32[16,32], index: 4, kind: output, shape index: {}]
  %s5 = sld [smem:[#allocation0]]
  $region49: #{tensorized_layer.1} parent=0
    _
  %s7 = ssub.s32 1, %s5
  %s8 = scalar_select 0, %s7, %s5
  $region1: #{tensorized_layer.1} parent=0
    #allocation3 [shape = 'u8[8192]{0}', space=vmem, size = 0x2000, scoped, tag = 'output window, operand 0']
    #allocation4 [shape = 's32[2]{0}', space=sflag, size = 0x8, scoped, tag = 'scoped memory for tensorized_layer.1']
    %9 = vsyncpa [#allocation4], 0
    %s10 = scalar_lea.sflag [#allocation4], 1
    %11 = vsyncpa %s10, 0
    loop: start=0, step=1, limit=4
    $region2: #{tensorized_layer.1} parent=1 // loop_pre_header
      _
    $region3: #{tensorized_layer.1} parent=1 // loop_header
      %s13 = sphi 0, %s17
      %p14 = scmp.ge.s32.totalorder %s13, 4
      %s20 = sphi 0, %s32
      %s21 = sphi 0, %s28
      %s22 = sphi 0, %s20
      %s23 = sphi 0, %s21
      %s24 = sphi 0, %s22
      %s25 = sphi 0, %s23
      %s35 = sphi 0, %s37
      %s38 = sphi 0, %s35
      %s39 = sphi 0, %s38
      %s55 = sphi 0, %s39
      %s61 = sphi 0, %s63
      %s64 = sphi 0, %s61
      %s65 = sphi 0, %s64
      %s81 = sphi 0, %s65
      %s87 = sphi 0, %s89
      %s90 = sphi 0, %s87
      %s91 = sphi 0, %s90
      %s107 = sphi 0, %s91
      %s113 = sphi 0, %s115
      %s116 = sphi 0, %s113
      %s117 = sphi 0, %s116
      %s133 = sphi 0, %s117
      %s141 = sphi 0, %s143
      %s144 = sphi 0, %s141
      %s145 = sphi 0, %s144
      %s161 = sphi 0, %s145
    $region4: #{tensorized_layer.1} parent=1 // loop_header_branch
      %16 = sbr.rel (%p14) target = $region8
    $region5: #{tensorized_layer.1} parent=1 // loop_body
      %s18 = ssub.s32 %s13, 1
      %s19 = ssub.s32 %s13, 2
      %s26 = sadd.s32 1, %s21
      %p27 = scmp.ge.s32.totalorder %s26, 2
      %s28 = scalar_select %p27, 0, %s26
      %s29 = sadd.s32 1, %s20
      %s30 = scalar_select %p27, %s29, %s20
      %p31 = scmp.ge.s32.totalorder %s30, 1
      %s32 = scalar_select %p31, 0, %s30
      %s33 = ssub.s32 %s21, %s28
      %p34 = scmp.eq.s32.totalorder %s33, 0
      %s36 = sadd.s32 %s35, 1
      %s37 = scalar_select %p34, %s35, %s36
      %p40 = pneg %p34
      %p41 = scmp.eq.s32.totalorder %s13, 1
      %p42 = por %p40, %p41
      %p43 = scmp.ne.s32.totalorder %s35, %s38
      %p44 = scmp.eq.s32.totalorder %s13, 0
      %p45 = por %p43, %p44
      %p46 = scmp.ne.s32.totalorder %s35, %s38
      %p47 = scmp.eq.s32.totalorder %s18, 1
      %p48 = por %p46, %p47
      %p49 = scmp.ne.s32.totalorder %s38, %s39
      %p50 = scmp.eq.s32.totalorder %s18, 0
      %p51 = por %p49, %p50
      %p52 = scmp.ne.s32.totalorder %s38, %s39
      %p53 = scmp.eq.s32.totalorder %s19, 1
      %p54 = por %p52, %p53
      %p56 = scmp.ne.s32.totalorder %s39, %s55
      %p57 = scmp.eq.s32.totalorder %s19, 0
      %p58 = por %p56, %p57
      %s59 = ssub.s32 %s21, %s28
      %p60 = scmp.eq.s32.totalorder %s59, 0
      %s62 = sadd.s32 %s61, 1
      %s63 = scalar_select %p60, %s61, %s62
      %p66 = pneg %p60
      %p67 = scmp.eq.s32.totalorder %s13, 1
      %p68 = por %p66, %p67
      %p69 = scmp.ne.s32.totalorder %s61, %s64
      %p70 = scmp.eq.s32.totalorder %s13, 0
      %p71 = por %p69, %p70
      %p72 = scmp.ne.s32.totalorder %s61, %s64
      %p73 = scmp.eq.s32.totalorder %s18, 1
      %p74 = por %p72, %p73
      %p75 = scmp.ne.s32.totalorder %s64, %s65
      %p76 = scmp.eq.s32.totalorder %s18, 0
      %p77 = por %p75, %p76
      %p78 = scmp.ne.s32.totalorder %s64, %s65
      %p79 = scmp.eq.s32.totalorder %s19, 1
      %p80 = por %p78, %p79
      %p82 = scmp.ne.s32.totalorder %s65, %s81
      %p83 = scmp.eq.s32.totalorder %s19, 0
      %p84 = por %p82, %p83
      %s85 = ssub.s32 %s20, %s32
      %p86 = scmp.eq.s32.totalorder %s85, 0
      %s88 = sadd.s32 %s87, 1
      %s89 = scalar_select %p86, %s87, %s88
      %p92 = pneg %p86
      %p93 = scmp.eq.s32.totalorder %s13, 1
      %p94 = por %p92, %p93
      %p95 = scmp.ne.s32.totalorder %s87, %s90
      %p96 = scmp.eq.s32.totalorder %s13, 0
      %p97 = por %p95, %p96
      %p98 = scmp.ne.s32.totalorder %s87, %s90
      %p99 = scmp.eq.s32.totalorder %s18, 1
      %p100 = por %p98, %p99
      %p101 = scmp.ne.s32.totalorder %s90, %s91
      %p102 = scmp.eq.s32.totalorder %s18, 0
      %p103 = por %p101, %p102
      %p104 = scmp.ne.s32.totalorder %s90, %s91
      %p105 = scmp.eq.s32.totalorder %s19, 1
      %p106 = por %p104, %p105
      %p108 = scmp.ne.s32.totalorder %s91, %s107
      %p109 = scmp.eq.s32.totalorder %s19, 0
      %p110 = por %p108, %p109
      %s111 = ssub.s32 %s20, %s32
      %p112 = scmp.eq.s32.totalorder %s111, 0
      %s114 = sadd.s32 %s113, 1
      %s115 = scalar_select %p112, %s113, %s114
      %p118 = pneg %p112
      %p119 = scmp.eq.s32.totalorder %s13, 1
      %p120 = por %p118, %p119
      %p121 = scmp.ne.s32.totalorder %s113, %s116
      %p122 = scmp.eq.s32.totalorder %s13, 0
      %p123 = por %p121, %p122
      %p124 = scmp.ne.s32.totalorder %s113, %s116
      %p125 = scmp.eq.s32.totalorder %s18, 1
      %p126 = por %p124, %p125
      %p127 = scmp.ne.s32.totalorder %s116, %s117
      %p128 = scmp.eq.s32.totalorder %s18, 0
      %p129 = por %p127, %p128
      %p130 = scmp.ne.s32.totalorder %s116, %s117
      %p131 = scmp.eq.s32.totalorder %s19, 1
      %p132 = por %p130, %p131
      %p134 = scmp.ne.s32.totalorder %s117, %s133
      %p135 = scmp.eq.s32.totalorder %s19, 0
      %p136 = por %p134, %p135
      %s137 = ssub.s32 %s21, %s28
      %s138 = ssub.s32 %s20, %s32
      %s139 = sor.u32 %s137, %s138
      %p140 = scmp.eq.s32.totalorder %s139, 0
      %s142 = sadd.s32 %s141, 1
      %s143 = scalar_select %p140, %s141, %s142
      %p146 = pneg %p140
      %p147 = scmp.eq.s32.totalorder %s13, 1
      %p148 = por %p146, %p147
      %p149 = scmp.ne.s32.totalorder %s141, %s144
      %p150 = scmp.eq.s32.totalorder %s13, 0
      %p151 = por %p149, %p150
      %p152 = scmp.ne.s32.totalorder %s141, %s144
      %p153 = scmp.eq.s32.totalorder %s18, 1
      %p154 = por %p152, %p153
      %p155 = scmp.ne.s32.totalorder %s144, %s145
      %p156 = scmp.eq.s32.totalorder %s18, 0
      %p157 = por %p155, %p156
      %p158 = scmp.ne.s32.totalorder %s144, %s145
      %p159 = scmp.eq.s32.totalorder %s19, 1
      %p160 = por %p158, %p159
      %p162 = scmp.ne.s32.totalorder %s145, %s161
      %p163 = scmp.eq.s32.totalorder %s19, 0
      %p164 = por %p162, %p163
      %p165 = scmp.le.s32.totalorder 1, %s13
      %p166 = scmp.lt.s32.totalorder %s13, 3
      %p167 = pnand %p165, %p166
      %p168 = pneg %p167
      // Predicated region
      $region9: #{tensorized_layer.1} parent=5 // pred_check
        _
      $region10: #{tensorized_layer.1} parent=5 // pred_check_branch
        %170 = sbr.rel (%p167) target = $region12
      $region11: #{tensorized_layer.1} parent=5 // pred_region
        %s171 = ssub.s32 %s13, 1
        // Predicated region
        $region13: #{tensorized_layer.1} parent=11 // pred_check
          %p172 = pneg %p103
        $region14: #{tensorized_layer.1} parent=11 // pred_check_branch
          %174 = sbr.rel (%p172) target = $region16
        $region15: #{tensorized_layer.1} parent=11 // pred_region
          %p175 = scmp.lt.s32.totalorder %s22, 0
          %s176 = scalar_select %p175, %s22, 0
          %s177 = smul.addr %s176, 8
          %s178 = scalar_lea.vmem %s2, %s177
        $region16: #{tensorized_layer.1} parent=11 // pred_fallthru
          _
        // Predicated region
        $region17: #{tensorized_layer.1} parent=11 // pred_check
          %p179 = pneg %p129
        $region18: #{tensorized_layer.1} parent=11 // pred_check_branch
          %181 = sbr.rel (%p179) target = $region20
        $region19: #{tensorized_layer.1} parent=11 // pred_region
          %p182 = scmp.lt.s32.totalorder %s22, 0
          %s183 = scalar_select %p182, %s22, 0
          %s184 = scalar_lea.vmem %s3, %s183
        $region20: #{tensorized_layer.1} parent=11 // pred_fallthru
          _
      $region12: #{tensorized_layer.1} parent=5 // pred_fallthru
        _
      %p185 = scmp.lt.s32.totalorder %s13, 2
      // Predicated region
      $region21: #{tensorized_layer.1} parent=5 // pred_check
        %p186 = pneg %p185
      $region22: #{tensorized_layer.1} parent=5 // pred_check_branch
        %188 = sbr.rel (%p186) target = $region24
      $region23: #{tensorized_layer.1} parent=5 // pred_region
        // Predicated region
        $region25: #{tensorized_layer.1} parent=23 // pred_check
          %p189 = pneg %p45
        $region26: #{tensorized_layer.1} parent=23 // pred_check_branch
          %191 = sbr.rel (%p189) target = $region28
        $region27: #{tensorized_layer.1} parent=23 // pred_region
          %p192 = scmp.lt.s32.totalorder %s21, 1
          %s193 = scalar_select %p192, %s21, 1
          %s194 = smul.addr %s193, 8
          %s195 = scalar_lea.vmem %s0, %s194
        $region28: #{tensorized_layer.1} parent=23 // pred_fallthru
          _
        // Predicated region
        $region29: #{tensorized_layer.1} parent=23 // pred_check
          %p196 = pneg %p71
        $region30: #{tensorized_layer.1} parent=23 // pred_check_branch
          %198 = sbr.rel (%p196) target = $region32
        $region31: #{tensorized_layer.1} parent=23 // pred_region
          %p199 = scmp.lt.s32.totalorder %s21, 1
          %s200 = scalar_select %p199, %s21, 1
          %s201 = smul.addr %s200, 8
          %s202 = scalar_lea.vmem %s1, %s201
        $region32: #{tensorized_layer.1} parent=23 // pred_fallthru
          _
      $region24: #{tensorized_layer.1} parent=5 // pred_fallthru
        _
      %p203 = scmp.le.s32.totalorder 1, %s13
      %p204 = scmp.lt.s32.totalorder %s13, 3
      %p205 = pnand %p203, %p204
      %p206 = pneg %p205
      // Predicated region
      $region33: #{tensorized_layer.1} parent=5 // pred_check
        _
      $region34: #{tensorized_layer.1} parent=5 // pred_check_branch
        %208 = sbr.rel (%p205) target = $region36
      $region35: #{tensorized_layer.1} parent=5 // pred_region
        %s209 = ssub.s32 %s13, 1
        %p210 = scmp.lt.s32.totalorder %s23, 1
        %s211 = scalar_select %p210, %s23, 1
        %s212 = smul.addr %s211, 8
        %s213 = scalar_lea.vmem %s0, %s212
        %p214 = pneg %p51
        %p215 = pneg %p48
        %p216 = scmp.lt.s32.totalorder %s23, 1
        %s217 = scalar_select %p216, %s23, 1
        %s218 = smul.addr %s217, 8
        %s219 = scalar_lea.vmem %s1, %s218
        %p220 = pneg %p77
        %p221 = pneg %p74
        %p222 = scmp.lt.s32.totalorder %s22, 0
        %s223 = scalar_select %p222, %s22, 0
        %s224 = smul.addr %s223, 8
        %s225 = scalar_lea.vmem %s2, %s224
        %p226 = pneg %p103
        %p227 = pneg %p100
        %p228 = scmp.lt.s32.totalorder %s22, 0
        %s229 = scalar_select %p228, %s22, 0
        %s230 = scalar_lea.vmem %s3, %s229
        %p231 = pneg %p129
        %p232 = pneg %p126
        %p233 = pneg %p157
        %p234 = pneg %p154
        %s235 = sand.u32 %s144, 1
        %s236 = scalar_lea.sflag [#allocation4], %s235
        %s237 = sand.u32 %s144, 1
        %s238 = smul.addr %s237, 8
        %s239 = scalar_lea.vmem [#allocation3], %s238
        %p240 = scmp.lt.s32.totalorder %s23, 1
        %s241 = scalar_select %p240, %s23, 1
        %s242 = smul.addr %s241, 8
        %s243 = scalar_lea.vmem %s0, %s242
        %p244 = scmp.lt.s32.totalorder %s23, 1
        %s245 = scalar_select %p244, %s23, 1
        %s246 = smul.addr %s245, 8
        %s247 = scalar_lea.vmem %s1, %s246
        %p248 = scmp.lt.s32.totalorder %s22, 0
        %s249 = scalar_select %p248, %s22, 0
        %s250 = smul.addr %s249, 8
        %s251 = scalar_lea.vmem %s2, %s250
        %p252 = scmp.lt.s32.totalorder %s22, 0
        %s253 = scalar_select %p252, %s22, 0
        %s254 = scalar_lea.vmem %s3, %s253
        %v255 = vld [vmem:[%s243] sm:$0xff]
        %v256 = vld [vmem:[%s247] sm:$0xff]
        %258 = vset.pattern.permute.xlu0 0
        %259 = vperm.xlu0 %258, %v255
        %v260 = vpop.permute.xlu0 %259
        %v262 = vmul.f32 %v260, %v256
        %vm263 = vcmask 261120
        %264 = vst.msk [vmem:[#allocation2] sm:$0xff] %vm263, %v262
        %265 = vset.pattern.permute.xlu0 1
        %266 = vperm.xlu0 %265, %v255
        %v267 = vpop.permute.xlu0 %266
        %v269 = vmul.f32 %v267, %v256
        %271 = vrot.lane.b32.xlu0 %v269, 32
        %v272 = vpop.permute.xlu0 %271
        %vm274 = vcmask 523520
        %275 = vst.msk [vmem:[#allocation2] sm:$0xff] %vm274, %v272
        %276 = vset.pattern.permute.xlu0 2
        %277 = vperm.xlu0 %276, %v255
        %v278 = vpop.permute.xlu0 %277
        %v280 = vmul.f32 %v278, %v256
        %282 = vrot.lane.b32.xlu0 %v280, 64
        %v283 = vpop.permute.xlu0 %282
        %vm285 = vcmask 785920
        %286 = vst.msk [vmem:[#allocation2] sm:$0xff] %vm285, %v283
        %287 = vset.pattern.permute.xlu0 3
        %288 = vperm.xlu0 %287, %v255
        %v289 = vpop.permute.xlu0 %288
        %v291 = vmul.f32 %v289, %v256
        %293 = vrot.lane.b32.xlu0 %v291, 96
        %v294 = vpop.permute.xlu0 %293
        %vm296 = vcmask 1048320
        %297 = vst.msk [vmem:[#allocation2] sm:$0xff] %vm296, %v294
        %298 = vset.pattern.permute.xlu0 4
        %299 = vperm.xlu0 %298, %v255
        %v300 = vpop.permute.xlu0 %299
        %v302 = vmul.f32 %v300, %v256
        %303 = vst.msk [vmem:[#allocation2 + $0x8] sm:$0xff] %vm263, %v302
        %304 = vset.pattern.permute.xlu0 5
        %305 = vperm.xlu0 %304, %v255
        %v306 = vpop.permute.xlu0 %305
        %v308 = vmul.f32 %v306, %v256
        %310 = vrot.lane.b32.xlu0 %v308, 32
        %v311 = vpop.permute.xlu0 %310
        %313 = vst.msk [vmem:[#allocation2 + $0x8] sm:$0xff] %vm274, %v311
        %314 = vset.pattern.permute.xlu0 6
        %315 = vperm.xlu0 %314, %v255
        %v316 = vpop.permute.xlu0 %315
        %v318 = vmul.f32 %v316, %v256
        %320 = vrot.lane.b32.xlu0 %v318, 64
        %v321 = vpop.permute.xlu0 %320
        %323 = vst.msk [vmem:[#allocation2 + $0x8] sm:$0xff] %vm285, %v321
        %324 = vset.pattern.permute.xlu0 7
        %325 = vperm.xlu0 %324, %v255
        %v326 = vpop.permute.xlu0 %325
        %v328 = vmul.f32 %v326, %v256
        %330 = vrot.lane.b32.xlu0 %v328, 96
        %v331 = vpop.permute.xlu0 %330
        %333 = vst.msk [vmem:[#allocation2 + $0x8] sm:$0xff] %vm296, %v331
        %v334 = vld [vmem:[#allocation2] sm:$0xff]
        %v335 = vld [vmem:[#allocation2 + $0x8] sm:$0xff]
        %v336 = vld [vmem:[%s251] sm:$0xff]
        %v337 = vld [vmem:[%s251 + $0x8] sm:$0xff]
        %v338 = vld [vmem:[%s251 + $0x10] sm:$0xff]
        %v339 = vld [vmem:[%s251 + $0x18] sm:$0xff]
        %v340 = vld [vmem:[%s251 + $0x20] sm:$0xff]
        %v341 = vld [vmem:[%s251 + $0x28] sm:$0xff]
        %v342 = vld [vmem:[%s251 + $0x30] sm:$0xff]
        %v343 = vld [vmem:[%s251 + $0x38] sm:$0xff]
        %v344 = vld [vmem:[%s251 + $0x40] sm:$0xff]
        %v345 = vld [vmem:[%s251 + $0x48] sm:$0xff]
        %v346 = vld [vmem:[%s251 + $0x50] sm:$0xff]
        %v347 = vld [vmem:[%s251 + $0x58] sm:$0xff]
        %v348 = vld [vmem:[%s251 + $0x60] sm:$0xff]
        %v349 = vld [vmem:[%s251 + $0x68] sm:$0xff]
        %v350 = vld [vmem:[%s251 + $0x70] sm:$0xff]
        %v351 = vld [vmem:[%s251 + $0x78] sm:$0xff]
        %v352 = vld [vmem:[%s251 + $0x80] sm:$0xff]
        %v353 = vld [vmem:[%s251 + $0x88] sm:$0xff]
        %v354 = vld [vmem:[%s251 + $0x90] sm:$0xff]
        %v355 = vld [vmem:[%s251 + $0x98] sm:$0xff]
        %v356 = vld [vmem:[%s251 + $0xa0] sm:$0xff]
        %v357 = vld [vmem:[%s251 + $0xa8] sm:$0xff]
        %v358 = vld [vmem:[%s251 + $0xb0] sm:$0xff]
        %v359 = vld [vmem:[%s251 + $0xb8] sm:$0xff]
        %v360 = vld [vmem:[%s251 + $0xc0] sm:$0xff]
        %v361 = vld [vmem:[%s251 + $0xc8] sm:$0xff]
        %v362 = vld [vmem:[%s251 + $0xd0] sm:$0xff]
        %v363 = vld [vmem:[%s251 + $0xd8] sm:$0xff]
        %v364 = vld [vmem:[%s251 + $0xe0] sm:$0xff]
        %v365 = vld [vmem:[%s251 + $0xe8] sm:$0xff]
        %v366 = vld [vmem:[%s251 + $0xf0] sm:$0xff]
        %v367 = vld [vmem:[%s251 + $0xf8] sm:$0xff]
        %v368 = vld [vmem:[%s254] sm:$0x1]
        %v370 = vperm.slane %v368, 0
        %372 = vmatpush.msra.mxu0 %v351
        %373 = vmatpush.msra.mxu0 %v350
        %374 = vmatpush.msra.mxu0 %v349
        %375 = vmatpush.msra.mxu0 %v348
        %376 = vmatpush.msra.mxu0 %v347
        %377 = vmatpush.msra.mxu0 %v346
        %378 = vmatpush.msra.mxu0 %v345
        %379 = vmatpush.msra.mxu0 %v344
        %380 = vmatpush.msra.mxu0 %v343
        %381 = vmatpush.msra.mxu0 %v342
        %382 = vmatpush.msra.mxu0 %v341
        %383 = vmatpush.msra.mxu0 %v340
        %384 = vmatpush.msra.mxu0 %v339
        %385 = vmatpush.msra.mxu0 %v338
        %386 = vmatpush.msra.mxu0 %v337
        %387 = vmatpush.msra.mxu0 %v336
        %388 = vmatmul.f32.gmra.mxu0 %v334
        %v389 = vpop.f32.mrf.mxu0
        %v390 = vadd.f32 %v370, %v389
        %391 = vdwg.mxu0
        %392 = vmatpush.msra.mxu0 %v367
        %393 = vmatpush.msra.mxu0 %v366
        %394 = vmatpush.msra.mxu0 %v365
        %395 = vmatpush.msra.mxu0 %v364
        %396 = vmatpush.msra.mxu0 %v363
        %397 = vmatpush.msra.mxu0 %v362
        %398 = vmatpush.msra.mxu0 %v361
        %399 = vmatpush.msra.mxu0 %v360
        %400 = vmatpush.msra.mxu0 %v359
        %401 = vmatpush.msra.mxu0 %v358
        %402 = vmatpush.msra.mxu0 %v357
        %403 = vmatpush.msra.mxu0 %v356
        %404 = vmatpush.msra.mxu0 %v355
        %405 = vmatpush.msra.mxu0 %v354
        %406 = vmatpush.msra.mxu0 %v353
        %407 = vmatpush.msra.mxu0 %v352
        %408 = vmatmul.f32.gmra.mxu0 %v335
        %v409 = vpop.f32.mrf.mxu0
        %v410 = vadd.f32 %v390, %v409
        %411 = vdwg.mxu0
        %412 = vst.msk [vmem:[%s239] sm:$0xff] %vm263, %v410
        %s413 = sand.u32 %s144, 1
        %s414 = scalar_lea.sflag [#allocation4], %s413
        %s415 = sand.u32 %s144, 1
        %s416 = smul.addr %s415, 8
        %s417 = scalar_lea.vmem [#allocation3], %s416
        // Predicated region
        $region37: #{tensorized_layer.1} parent=35 // pred_check
          %p418 = pneg %p154
        $region38: #{tensorized_layer.1} parent=35 // pred_check_branch
          %420 = sbr.rel (%p418) target = $region40
        $region39: #{tensorized_layer.1} parent=35 // pred_region
          %422 = vsyncadd %s414, 0
          %s423 = sadd.s32 %s22, %s23
          %s424 = smul.addr %s423, 8
          %s425 = scalar_lea.hbm %s4, %s424
          %s427 = sshll.u32 %s417, 4
          %s428 = int_to_ptr.vmem [resolvable:$true] %s427
          %s429 = sshll.u32 %s425, 4
          %s430 = int_to_ptr.hbm [resolvable:$true] %s429
          %432 = dma.vmem_to_hbm [thread:$0]  %s428, 128, %s430, %s414
        $region40: #{tensorized_layer.1} parent=35 // pred_fallthru
          _
      $region36: #{tensorized_layer.1} parent=5 // pred_fallthru
        _
      %p433 = scmp.le.s32.totalorder 2, %s13
      // Predicated region
      $region41: #{tensorized_layer.1} parent=5 // pred_check
        %p434 = pneg %p433
      $region42: #{tensorized_layer.1} parent=5 // pred_check_branch
        %436 = sbr.rel (%p434) target = $region44
      $region43: #{tensorized_layer.1} parent=5 // pred_region
        %s437 = ssub.s32 %s13, 2
        // Predicated region
        $region45: #{tensorized_layer.1} parent=43 // pred_check
          %p438 = pneg %p160
        $region46: #{tensorized_layer.1} parent=43 // pred_check_branch
          %440 = sbr.rel (%p438) target = $region48
        $region47: #{tensorized_layer.1} parent=43 // pred_region
          %s441 = sand.u32 %s145, 1
          %s442 = scalar_lea.sflag [#allocation4], %s441
          %s443 = sand.u32 %s145, 1
          %s444 = smul.addr %s443, 8
          %s445 = scalar_lea.vmem [#allocation3], %s444
          %447 = dma.done %s442, 128
        $region48: #{tensorized_layer.1} parent=43 // pred_fallthru
          _
      $region44: #{tensorized_layer.1} parent=5 // pred_fallthru
        _
    $region6: #{tensorized_layer.1} parent=1 // loop_footer
      %s17 = sadd.s32 1, %s13
    $region7: #{tensorized_layer.1} parent=1 // loop_footer_branch
      %12 = sbr.rel target = $region3
    $region8: #{tensorized_layer.1} parent=1 // loop_exit
      _
    %448 = vsyncpa [#allocation4], 1
    %s449 = scalar_lea.sflag [#allocation4], 1
    %450 = vsyncpa %s449, 1

</llo_original>
